<compile_context>
chip_gen: v7x
topology: tpu7x:2x2x1
jax: 0.10.0
libtpu: 0.0.40
codegen_flags: <defaults>
</compile_context>

<pallas_src>
import functools
import math

import jax
import jax.numpy as jnp
from jax.experimental import pallas as pl
from jax.experimental.pallas import tpu as pltpu


# ---------------------------------------------------------------------------
# Kernels
# ---------------------------------------------------------------------------
def _attn_body(x, wq, wk, wv, mask, o_ref, *, batch, seq, compute_dtype):
    """x: (batch*seq, E); wq/wk/wv: (E, D) pre-transposed (scale folded in wq);
    mask: optional (batch, seq, seq) f32; o_ref block: (1, batch, seq*Dv)."""
    dk = wq.shape[-1]
    dv = wv.shape[-1]

    # Projections: large M (= batch*seq rows), narrow operands, f32 accumulate.
    xc = x.astype(compute_dtype)
    q = jnp.dot(xc, wq, preferred_element_type=jnp.float32)        # (B*L, Dk)
    k = jnp.dot(xc, wk, preferred_element_type=jnp.float32)        # (B*L, Dk)
    v = jnp.dot(xc, wv, preferred_element_type=jnp.float32)        # (B*L, Dv)

    qb = q.reshape(batch, seq, dk).astype(compute_dtype)
    kb = k.reshape(batch, seq, dk).astype(compute_dtype)
    vb = v.reshape(batch, seq, dv).astype(compute_dtype)

    # scores already carry the 1/sqrt(Dk) scale (folded into W_q).
    scores = jnp.einsum("bqd,bkd->bqk", qb, kb,
                        preferred_element_type=jnp.float32)        # (B, L, L) f32
    if mask is not None:
        scores = scores + mask

    # Numerically-stable softmax; reciprocal goes to the otherwise-idle EUP.
    m = jnp.max(scores, axis=-1, keepdims=True)
    p = jnp.exp(scores - m)
    denom = jnp.sum(p, axis=-1, keepdims=True)
    attn = (p * pl.reciprocal(denom, approx=True)).astype(compute_dtype)

    out = jnp.einsum("bqk,bkv->bqv", attn, vb,
                     preferred_element_type=jnp.float32)           # (B, L, Dv)
    # Lane-dense store: last dim is seq*dv (>= dv), full block extent.
    o_ref[...] = out.reshape(1, batch, seq * dv).astype(o_ref.dtype)


def _attn_kernel_nomask(x_ref, wq_ref, wk_ref, wv_ref, o_ref, *,
                        batch, seq, compute_dtype):
    _attn_body(x_ref[0], wq_ref[...], wk_ref[...], wv_ref[...],
               None, o_ref, batch=batch, seq=seq, compute_dtype=compute_dtype)


def _attn_kernel_masked(x_ref, wq_ref, wk_ref, wv_ref, mask_ref, o_ref, *,
                        batch, seq, compute_dtype):
    _attn_body(x_ref[0], wq_ref[...], wk_ref[...], wv_ref[...],
               mask_ref[0].astype(jnp.float32), o_ref,
               batch=batch, seq=seq, compute_dtype=compute_dtype)


# ---------------------------------------------------------------------------
# VMEM-aware batch-block sizing
# ---------------------------------------------------------------------------
def _vmem_capacity_bytes():
    """Physical VMEM per core; conservative 64 MiB (v7x) fallback."""
    try:
        info = pltpu.get_tpu_info()
        cap = getattr(info, "vmem_capacity_bytes", None)
        if cap:
            return int(cap)
    except Exception:
        pass
    return 64 * 1024 * 1024


def _estimate_vmem_bytes(b, L, E, Dk, Dv, has_mask, x_bytes, c_bytes, out_bytes):
    """Per-grid-step VMEM residents (double-buffered blocks + intermediates)."""
    rows = b * L
    use = 2 * rows * E * x_bytes                   # X block (double-buffered)
    use += 2 * E * (2 * Dk + Dv) * c_bytes         # weights (double-buffered)
    use += 2 * rows * Dv * out_bytes               # out block (double-buffered)
    if has_mask:
        use += 2 * b * L * L * c_bytes             # mask block (double-buffered)
    use += rows * (2 * Dk + Dv) * (4 + c_bytes)    # f32 q/k/v + compute copies
    use += b * L * L * (3 * 4 + c_bytes)           # ~3 live f32 L^2 + attn copy
    use += rows * Dv * 4                           # f32 out temp
    return use


def _pick_batch_block(N, L, budget, est_fn):
    """Largest divisor of N that fits `budget`, capped at N//2 (when N >= 2) so
    the parallel grid has >=2 steps and both v7x TensorCores stay busy."""
    cap = N if N < 2 else max(1, N // 2)
    best = 1
    for b in range(1, cap + 1):
        if N % b != 0:
            continue
        if est_fn(b) <= budget:
            best = b
    return best


# ---------------------------------------------------------------------------
# Wrapper
# ---------------------------------------------------------------------------
def self_attention(x, w_q, w_k, w_v, attn_mask=None,
                   compute_dtype=jnp.bfloat16):
    """x: (N, L, E); w_q/w_k: (Dk, E); w_v: (Dv, E) (PyTorch nn.Linear layout);
    attn_mask: optional additive (N, L, L).  `compute_dtype` sets the MXU
    operand precision (bf16 fast path, f32 exact path); accumulation is f32."""
    N, L, E = x.shape
    Dk = w_q.shape[0]
    Dv = w_v.shape[0]
    scale = 1.0 / math.sqrt(Dk)
    compute_dtype = jnp.dtype(compute_dtype)

    # One-time layout fixes: (out,in) -> (in,out); fold scale into W_q.
    wq_t = (w_q.T * scale).astype(compute_dtype)                   # (E, Dk)
    wk_t = w_k.T.astype(compute_dtype)                             # (E, Dk)
    wv_t = w_v.T.astype(compute_dtype)                             # (E, Dv)

    vmem_cap = _vmem_capacity_bytes()
    budget = int(0.75 * vmem_cap)
    est = functools.partial(
        _estimate_vmem_bytes, L=L, E=E, Dk=Dk, Dv=Dv,
        has_mask=attn_mask is not None,
        x_bytes=jnp.dtype(x.dtype).itemsize,
        c_bytes=compute_dtype.itemsize,
        out_bytes=jnp.dtype(x.dtype).itemsize)
    b_blk = _pick_batch_block(N, L, budget, est)
    G = N // b_blk
    rows = b_blk * L

    # 3D/4D layouts whose blocks cover the full last-two dims -> the (8,128)
    # block rule holds for any L / b_blk, and the output last dim is L*Dv.
    x_g = x.reshape(G, rows, E)

    common_in_specs = [
        pl.BlockSpec((1, rows, E), lambda i: (i, 0, 0)),   # X rows for this block
        pl.BlockSpec((E, Dk), lambda i: (0, 0)),           # W_q^T * scale (invariant)
        pl.BlockSpec((E, Dk), lambda i: (0, 0)),           # W_k^T
        pl.BlockSpec((E, Dv), lambda i: (0, 0)),           # W_v^T
    ]
    out_spec = pl.BlockSpec((1, b_blk, L * Dv), lambda i: (i, 0, 0))
    out_shape = jax.ShapeDtypeStruct((G, b_blk, L * Dv), x.dtype)
    cparams = pltpu.CompilerParams(
        dimension_semantics=("parallel",),
        vmem_limit_bytes=budget,
    )

    if attn_mask is None:
        kernel = functools.partial(_attn_kernel_nomask, batch=b_blk, seq=L,
                                   compute_dtype=compute_dtype)
        out_g = pl.pallas_call(
            kernel,
            out_shape=out_shape,
            grid_spec=pltpu.PrefetchScalarGridSpec(
                num_scalar_prefetch=0,
                grid=(G,),
                in_specs=common_in_specs,
                out_specs=out_spec,
            ),
            compiler_params=cparams,
        )(x_g, wq_t, wk_t, wv_t)
    else:
        kernel = functools.partial(_attn_kernel_masked, batch=b_blk, seq=L,
                                   compute_dtype=compute_dtype)
        mask_g = attn_mask.astype(compute_dtype).reshape(G, b_blk, L, L)
        mask_spec = pl.BlockSpec((1, b_blk, L, L), lambda i: (i, 0, 0, 0))
        out_g = pl.pallas_call(
            kernel,
            out_shape=out_shape,
            grid_spec=pltpu.PrefetchScalarGridSpec(
                num_scalar_prefetch=0,
                grid=(G,),
                in_specs=common_in_specs + [mask_spec],
                out_specs=out_spec,
            ),
            compiler_params=cparams,
        )(x_g, wq_t, wk_t, wv_t, mask_g)

    return out_g.reshape(N, L, Dv)


# ---------------------------------------------------------------------------
# Pure-JAX reference
# ---------------------------------------------------------------------------
def _reference(x, w_q, w_k, w_v, attn_mask=None):
    q = jnp.einsum("nle,ke->nlk", x, w_q)
    k = jnp.einsum("nle,ke->nlk", x, w_k)
    v = jnp.einsum("nle,ve->nlv", x, w_v)
    scores = jnp.einsum("nqk,npk->nqp", q, k) / math.sqrt(w_q.shape[0])
    if attn_mask is not None:
        scores = scores + attn_mask
    attn = jax.nn.softmax(scores, axis=-1)
    return jnp.einsum("nqp,npv->nqv", attn, v)


if __name__ == "__main__":
    # Small shapes consistent with the module's forward: X is (N, L, embed_dim)
    N, L = 2, 8
    embed_dim, key_size, value_size = 32, 16, 16

    key = jax.random.PRNGKey(0)
    kx, kq, kk, kv, km = jax.random.split(key, 5)

    x = jax.random.normal(kx, (N, L, embed_dim), dtype=jnp.float32)

    # Deterministic nn.Linear-style init: U(-1/sqrt(in), 1/sqrt(in)), shape (out, in)
    bound = 1.0 / math.sqrt(embed_dim)
    w_q = jax.random.uniform(kq, (key_size, embed_dim), jnp.float32, -bound, bound)
    w_k = jax.random.uniform(kk, (key_size, embed_dim), jnp.float32, -bound, bound)
    w_v = jax.random.uniform(kv, (value_size, embed_dim), jnp.float32, -bound, bound)
    mask = 0.1 * jax.random.normal(km, (N, L, L), dtype=jnp.float32)

    ref = _reference(x, w_q, w_k, w_v, attn_mask=None)
    ref_m = _reference(x, w_q, w_k, w_v, attn_mask=mask)

    # --- exact (f32 MXU operands) path: tight tolerance ---
    out_f32 = jax.block_until_ready(
        self_attention(x, w_q, w_k, w_v, attn_mask=None, compute_dtype=jnp.float32))
    assert out_f32.shape == (N, L, value_size)
    assert jnp.allclose(out_f32, ref, atol=2e-3, rtol=2e-3), "mismatch (f32, no mask)"

    out_f32_m = jax.block_until_ready(
        self_attention(x, w_q, w_k, w_v, attn_mask=mask, compute_dtype=jnp.float32))
    assert jnp.allclose(out_f32_m, ref_m, atol=2e-3, rtol=2e-3), "mismatch (f32, masked)"

    # --- fast (bf16 MXU operands, f32 accumulate) path: relaxed tolerance ---
    out_bf16 = jax.block_until_ready(
        self_attention(x, w_q, w_k, w_v, attn_mask=None))
    assert jnp.allclose(out_bf16, ref, atol=2e-2, rtol=2e-2), "mismatch (bf16, no mask)"

    out_bf16_m = jax.block_until_ready(
        self_attention(x, w_q, w_k, w_v, attn_mask=mask))
    assert jnp.allclose(out_bf16_m, ref_m, atol=2e-2, rtol=2e-2), "mismatch (bf16, masked)"

    print("KERNEL_OK")
</pallas_src>

<mosaic_0001>
module attributes {stable_mosaic.version = 11 : i64} {
  func.func @_attn_kernel_nomask(%arg0: i32, %arg1: memref<1x8x32xf32, #tpu.memory_space<vmem>>, %arg2: memref<32x16xf32, #tpu.memory_space<vmem>>, %arg3: memref<32x16xf32, #tpu.memory_space<vmem>>, %arg4: memref<32x16xf32, #tpu.memory_space<vmem>>, %arg5: memref<1x1x128xf32, #tpu.memory_space<vmem>>) attributes {dimension_semantics = [#tpu.dimension_semantics<parallel>], iteration_bounds = array<i64: 2>, scalar_prefetch = 0 : i64, scratch_operands = 0 : i64, tpu.core_type = #tpu.core_type<tc>, window_params = [{transform_indices = @transform_0, window_bounds = array<i64: 1, 8, 32>}, {pipeline_mode = #tpu.pipeline_mode<synchronous>, transform_indices = @transform_1, window_bounds = array<i64: 32, 16>}, {pipeline_mode = #tpu.pipeline_mode<synchronous>, transform_indices = @transform_2, window_bounds = array<i64: 32, 16>}, {pipeline_mode = #tpu.pipeline_mode<synchronous>, transform_indices = @transform_3, window_bounds = array<i64: 32, 16>}, {transform_indices = @transform_4, window_bounds = array<i64: 1, 1, 128>}]} {
    %c0 = arith.constant 0 : index
    %c0_0 = arith.constant 0 : index
    %c0_1 = arith.constant 0 : index
    %0 = vector.load %arg1[%c0, %c0_0, %c0_1] : memref<1x8x32xf32, #tpu.memory_space<vmem>>, vector<1x8x32xf32>
    %1 = vector.shape_cast %0 : vector<1x8x32xf32> to vector<8x32xf32>
    %c0_2 = arith.constant 0 : index
    %c0_3 = arith.constant 0 : index
    %2 = vector.load %arg2[%c0_2, %c0_3] : memref<32x16xf32, #tpu.memory_space<vmem>>, vector<32x16xf32>
    %c0_4 = arith.constant 0 : index
    %c0_5 = arith.constant 0 : index
    %3 = vector.load %arg3[%c0_4, %c0_5] : memref<32x16xf32, #tpu.memory_space<vmem>>, vector<32x16xf32>
    %c0_6 = arith.constant 0 : index
    %c0_7 = arith.constant 0 : index
    %4 = vector.load %arg4[%c0_6, %c0_7] : memref<32x16xf32, #tpu.memory_space<vmem>>, vector<32x16xf32>
    %cst = arith.constant dense<0.000000e+00> : vector<8x16xf32>
    %5 = tpu.matmul %1, %2, %cst {dimension_numbers = #tpu.dot_dimension_numbers<[1], [0], [0], [1], [0, 0, 1, 1], [], []>} : vector<8x32xf32>, vector<32x16xf32>, vector<8x16xf32> -> vector<8x16xf32>
    %cst_8 = arith.constant dense<0.000000e+00> : vector<8x16xf32>
    %6 = tpu.matmul %1, %3, %cst_8 {dimension_numbers = #tpu.dot_dimension_numbers<[1], [0], [0], [1], [0, 0, 1, 1], [], []>} : vector<8x32xf32>, vector<32x16xf32>, vector<8x16xf32> -> vector<8x16xf32>
    %cst_9 = arith.constant dense<0.000000e+00> : vector<8x16xf32>
    %7 = tpu.matmul %1, %4, %cst_9 {dimension_numbers = #tpu.dot_dimension_numbers<[1], [0], [0], [1], [0, 0, 1, 1], [], []>} : vector<8x32xf32>, vector<32x16xf32>, vector<8x16xf32> -> vector<8x16xf32>
    %8 = vector.shape_cast %5 : vector<8x16xf32> to vector<1x8x16xf32>
    %9 = vector.shape_cast %6 : vector<8x16xf32> to vector<1x8x16xf32>
    %10 = vector.shape_cast %7 : vector<8x16xf32> to vector<1x8x16xf32>
    "tpu.trace_start"() <{level = 10 : i32, message = "bqd,bkd->bqk"}> : () -> ()
    %cst_10 = arith.constant dense<0.000000e+00> : vector<1x8x8xf32>
    %11 = tpu.matmul %8, %9, %cst_10 {dimension_numbers = #tpu.dot_dimension_numbers<[2], [2], [1], [1], [0, 0, 0, 1, 1, 1], [0], [0]>} : vector<1x8x16xf32>, vector<1x8x16xf32>, vector<1x8x8xf32> -> vector<1x8x8xf32>
    "tpu.trace_stop"() : () -> ()
    %cst_11 = arith.constant dense<0xFF800000> : vector<1x8xf32>
    %12 = vector.multi_reduction <maximumf>, %11, %cst_11 [2] : vector<1x8x8xf32> to vector<1x8xf32>
    %13 = vector.shape_cast %12 : vector<1x8xf32> to vector<1x8x1xf32>
    %14 = vector.broadcast %13 : vector<1x8x1xf32> to vector<1x8x8xf32>
    %15 = arith.subf %11, %14 : vector<1x8x8xf32>
    %16 = math.exp %15 : vector<1x8x8xf32>
    %cst_12 = arith.constant dense<0.000000e+00> : vector<1x8xf32>
    %17 = vector.multi_reduction <add>, %16, %cst_12 [2] : vector<1x8x8xf32> to vector<1x8xf32>
    %18 = vector.shape_cast %17 : vector<1x8xf32> to vector<1x8x1xf32>
    %19 = tpu.reciprocal %18 {approx = true} : vector<1x8x1xf32> -> vector<1x8x1xf32>
    %20 = vector.broadcast %19 : vector<1x8x1xf32> to vector<1x8x8xf32>
    %21 = arith.mulf %16, %20 : vector<1x8x8xf32>
    "tpu.trace_start"() <{level = 10 : i32, message = "bqk,bkv->bqv"}> : () -> ()
    %cst_13 = arith.constant dense<0.000000e+00> : vector<1x8x16xf32>
    %22 = tpu.matmul %21, %10, %cst_13 {dimension_numbers = #tpu.dot_dimension_numbers<[2], [1], [1], [2], [0, 0, 0, 1, 1, 2], [0], [0]>} : vector<1x8x8xf32>, vector<1x8x16xf32>, vector<1x8x16xf32> -> vector<1x8x16xf32>
    "tpu.trace_stop"() : () -> ()
    %23 = vector.shape_cast %22 : vector<1x8x16xf32> to vector<1x1x128xf32>
    %c0_14 = arith.constant 0 : index
    %c0_15 = arith.constant 0 : index
    %c0_16 = arith.constant 0 : index
    %24 = vector.load %arg5[%c0_14, %c0_15, %c0_16] : memref<1x1x128xf32, #tpu.memory_space<vmem>>, vector<1x1x128xf32>
    tpu.vector_store %arg5[%c0_14, %c0_15, %c0_16], %23 {strides = array<i32>} : memref<1x1x128xf32, #tpu.memory_space<vmem>>, vector<1x1x128xf32>,
    return
  }
  func.func @transform_0(%arg0: i32) -> (i32, i32, i32) {
    %c0_i32 = arith.constant 0 : i32
    %c0_i32_0 = arith.constant 0 : i32
    %c0_i32_1 = arith.constant 0 : i32
    return %arg0, %c0_i32, %c0_i32_0 : i32, i32, i32
  }
  func.func @transform_1(%arg0: i32) -> (i32, i32) {
    %c0_i32 = arith.constant 0 : i32
    %c0_i32_0 = arith.constant 0 : i32
    %c0_i32_1 = arith.constant 0 : i32
    return %c0_i32, %c0_i32_0 : i32, i32
  }
  func.func @transform_2(%arg0: i32) -> (i32, i32) {
    %c0_i32 = arith.constant 0 : i32
    %c0_i32_0 = arith.constant 0 : i32
    %c0_i32_1 = arith.constant 0 : i32
    return %c0_i32, %c0_i32_0 : i32, i32
  }
  func.func @transform_3(%arg0: i32) -> (i32, i32) {
    %c0_i32 = arith.constant 0 : i32
    %c0_i32_0 = arith.constant 0 : i32
    %c0_i32_1 = arith.constant 0 : i32
    return %c0_i32, %c0_i32_0 : i32, i32
  }
  func.func @transform_4(%arg0: i32) -> (i32, i32, i32) {
    %c0_i32 = arith.constant 0 : i32
    %c0_i32_0 = arith.constant 0 : i32
    %c0_i32_1 = arith.constant 0 : i32
    return %arg0, %c0_i32, %c0_i32_0 : i32, i32, i32
  }
}

</mosaic_0001>

<llo_original>
// kernel: tpu_custom_call.1
$region0: #{tpu_custom_call.1}
  #allocation0 [shape = 'u32[]', space=smem, size = 0x4, offset = 0x4, fixed_abs, tag = 'smem constant byte address 0x4 - core index']
  #allocation1 [shape = 'u32[144,128]{1,0:T(1,128)}', space=vmem, size = 0x12000, scoped, tag = 'internal scratch']
  %s0 = inlined_call_operand.vmem [shape: f32[2,8,32], index: 0, kind: input, shape index: {}]
  %s1 = inlined_call_operand.vmem [shape: f32[32,16], index: 1, kind: input, shape index: {}]
  %s2 = inlined_call_operand.vmem [shape: f32[32,16], index: 2, kind: input, shape index: {}]
  %s3 = inlined_call_operand.vmem [shape: f32[32,16], index: 3, kind: input, shape index: {}]
  %s4 = inlined_call_operand.hbm [shape: f32[2,1,128], index: 4, kind: output, shape index: {}]
  %s5 = sld [smem:[#allocation0]]
  $region49: #{tpu_custom_call.1} parent=0
    _
  %s7 = ssub.s32 1, %s5
  %s8 = scalar_select 0, %s7, %s5
  $region1: #{tpu_custom_call.1} parent=0
    #allocation2 [shape = 'u8[1024]{0}', space=vmem, size = 0x400, scoped, tag = 'output window, operand 0']
    #allocation3 [shape = 's32[2]{0}', space=sflag, size = 0x8, scoped, tag = 'scoped memory for tpu_custom_call.1']
    %9 = vsyncpa [#allocation3], 0
    %s10 = scalar_lea.sflag [#allocation3], 1
    %11 = vsyncpa %s10, 0
    loop: start=0, step=1, limit=4
    $region2: #{tpu_custom_call.1} parent=1 // loop_pre_header
      _
    $region3: #{tpu_custom_call.1} parent=1 // loop_header
      %s13 = sphi 0, %s17
      %p14 = scmp.ge.s32.totalorder %s13, 4
      %s23 = sphi 0, %s25
      %s26 = sphi 0, %s23
      %s27 = sphi 0, %s26
      %s43 = sphi 0, %s27
      %s47 = sphi 0, %s47
      %s49 = sphi 0, %s47
      %s50 = sphi 0, %s49
      %s64 = sphi 0, %s50
      %s68 = sphi 0, %s68
      %s70 = sphi 0, %s68
      %s71 = sphi 0, %s70
      %s85 = sphi 0, %s71
      %s89 = sphi 0, %s89
      %s91 = sphi 0, %s89
      %s92 = sphi 0, %s91
      %s106 = sphi 0, %s92
      %s112 = sphi 0, %s114
      %s115 = sphi 0, %s112
      %s116 = sphi 0, %s115
      %s132 = sphi 0, %s116
    $region4: #{tpu_custom_call.1} parent=1 // loop_header_branch
      %16 = sbr.rel (%p14) target = $region8
    $region5: #{tpu_custom_call.1} parent=1 // loop_body
      %s18 = ssub.s32 %s13, 1
      %s19 = ssub.s32 %s13, 2
      %s20 = sadd.s32 %s13, 1
      %s21 = ssub.s32 %s13, %s20
      %p22 = scmp.eq.s32.totalorder %s21, 0
      %s24 = sadd.s32 %s23, 1
      %s25 = scalar_select %p22, %s23, %s24
      %p28 = pneg %p22
      %p29 = scmp.eq.s32.totalorder %s13, 1
      %p30 = por %p28, %p29
      %p31 = scmp.ne.s32.totalorder %s23, %s26
      %p32 = scmp.eq.s32.totalorder %s13, 0
      %p33 = por %p31, %p32
      %p34 = scmp.ne.s32.totalorder %s23, %s26
      %p35 = scmp.eq.s32.totalorder %s18, 1
      %p36 = por %p34, %p35
      %p37 = scmp.ne.s32.totalorder %s26, %s27
      %p38 = scmp.eq.s32.totalorder %s18, 0
      %p39 = por %p37, %p38
      %p40 = scmp.ne.s32.totalorder %s26, %s27
      %p41 = scmp.eq.s32.totalorder %s19, 1
      %p42 = por %p40, %p41
      %p44 = scmp.ne.s32.totalorder %s27, %s43
      %p45 = scmp.eq.s32.totalorder %s19, 0
      %p46 = por %p44, %p45
      %s48 = sadd.s32 %s47, 1
      %p51 = scmp.eq.s32.totalorder %s13, 1
      %p52 = scmp.ne.s32.totalorder %s47, %s49
      %p53 = scmp.eq.s32.totalorder %s13, 0
      %p54 = por %p52, %p53
      %p55 = scmp.ne.s32.totalorder %s47, %s49
      %p56 = scmp.eq.s32.totalorder %s18, 1
      %p57 = por %p55, %p56
      %p58 = scmp.ne.s32.totalorder %s49, %s50
      %p59 = scmp.eq.s32.totalorder %s18, 0
      %p60 = por %p58, %p59
      %p61 = scmp.ne.s32.totalorder %s49, %s50
      %p62 = scmp.eq.s32.totalorder %s19, 1
      %p63 = por %p61, %p62
      %p65 = scmp.ne.s32.totalorder %s50, %s64
      %p66 = scmp.eq.s32.totalorder %s19, 0
      %p67 = por %p65, %p66
      %s69 = sadd.s32 %s68, 1
      %p72 = scmp.eq.s32.totalorder %s13, 1
      %p73 = scmp.ne.s32.totalorder %s68, %s70
      %p74 = scmp.eq.s32.totalorder %s13, 0
      %p75 = por %p73, %p74
      %p76 = scmp.ne.s32.totalorder %s68, %s70
      %p77 = scmp.eq.s32.totalorder %s18, 1
      %p78 = por %p76, %p77
      %p79 = scmp.ne.s32.totalorder %s70, %s71
      %p80 = scmp.eq.s32.totalorder %s18, 0
      %p81 = por %p79, %p80
      %p82 = scmp.ne.s32.totalorder %s70, %s71
      %p83 = scmp.eq.s32.totalorder %s19, 1
      %p84 = por %p82, %p83
      %p86 = scmp.ne.s32.totalorder %s71, %s85
      %p87 = scmp.eq.s32.totalorder %s19, 0
      %p88 = por %p86, %p87
      %s90 = sadd.s32 %s89, 1
      %p93 = scmp.eq.s32.totalorder %s13, 1
      %p94 = scmp.ne.s32.totalorder %s89, %s91
      %p95 = scmp.eq.s32.totalorder %s13, 0
      %p96 = por %p94, %p95
      %p97 = scmp.ne.s32.totalorder %s89, %s91
      %p98 = scmp.eq.s32.totalorder %s18, 1
      %p99 = por %p97, %p98
      %p100 = scmp.ne.s32.totalorder %s91, %s92
      %p101 = scmp.eq.s32.totalorder %s18, 0
      %p102 = por %p100, %p101
      %p103 = scmp.ne.s32.totalorder %s91, %s92
      %p104 = scmp.eq.s32.totalorder %s19, 1
      %p105 = por %p103, %p104
      %p107 = scmp.ne.s32.totalorder %s92, %s106
      %p108 = scmp.eq.s32.totalorder %s19, 0
      %p109 = por %p107, %p108
      %s110 = ssub.s32 %s13, %s20
      %p111 = scmp.eq.s32.totalorder %s110, 0
      %s113 = sadd.s32 %s112, 1
      %s114 = scalar_select %p111, %s112, %s113
      %p117 = pneg %p111
      %p118 = scmp.eq.s32.totalorder %s13, 1
      %p119 = por %p117, %p118
      %p120 = scmp.ne.s32.totalorder %s112, %s115
      %p121 = scmp.eq.s32.totalorder %s13, 0
      %p122 = por %p120, %p121
      %p123 = scmp.ne.s32.totalorder %s112, %s115
      %p124 = scmp.eq.s32.totalorder %s18, 1
      %p125 = por %p123, %p124
      %p126 = scmp.ne.s32.totalorder %s115, %s116
      %p127 = scmp.eq.s32.totalorder %s18, 0
      %p128 = por %p126, %p127
      %p129 = scmp.ne.s32.totalorder %s115, %s116
      %p130 = scmp.eq.s32.totalorder %s19, 1
      %p131 = por %p129, %p130
      %p133 = scmp.ne.s32.totalorder %s116, %s132
      %p134 = scmp.eq.s32.totalorder %s19, 0
      %p135 = por %p133, %p134
      %p136 = scmp.le.s32.totalorder 1, %s13
      %p137 = scmp.lt.s32.totalorder %s13, 3
      %p138 = pnand %p136, %p137
      %p139 = pneg %p138
      // Predicated region
      $region9: #{tpu_custom_call.1} parent=5 // pred_check
        _
      $region10: #{tpu_custom_call.1} parent=5 // pred_check_branch
        %141 = sbr.rel (%p138) target = $region12
      $region11: #{tpu_custom_call.1} parent=5 // pred_region
        %s142 = ssub.s32 %s13, 1
        // Predicated region
        $region13: #{tpu_custom_call.1} parent=11 // pred_check
          %p143 = pneg %p60
        $region14: #{tpu_custom_call.1} parent=11 // pred_check_branch
          %145 = sbr.rel (%p143) target = $region16
        $region15: #{tpu_custom_call.1} parent=11 // pred_region
          _
        $region16: #{tpu_custom_call.1} parent=11 // pred_fallthru
          _
        // Predicated region
        $region17: #{tpu_custom_call.1} parent=11 // pred_check
          %p146 = pneg %p81
        $region18: #{tpu_custom_call.1} parent=11 // pred_check_branch
          %148 = sbr.rel (%p146) target = $region20
        $region19: #{tpu_custom_call.1} parent=11 // pred_region
          _
        $region20: #{tpu_custom_call.1} parent=11 // pred_fallthru
          _
        // Predicated region
        $region21: #{tpu_custom_call.1} parent=11 // pred_check
          %p149 = pneg %p102
        $region22: #{tpu_custom_call.1} parent=11 // pred_check_branch
          %151 = sbr.rel (%p149) target = $region24
        $region23: #{tpu_custom_call.1} parent=11 // pred_region
          _
        $region24: #{tpu_custom_call.1} parent=11 // pred_fallthru
          _
      $region12: #{tpu_custom_call.1} parent=5 // pred_fallthru
        _
      %p152 = scmp.lt.s32.totalorder %s13, 2
      // Predicated region
      $region25: #{tpu_custom_call.1} parent=5 // pred_check
        %p153 = pneg %p152
      $region26: #{tpu_custom_call.1} parent=5 // pred_check_branch
        %155 = sbr.rel (%p153) target = $region28
      $region27: #{tpu_custom_call.1} parent=5 // pred_region
        // Predicated region
        $region29: #{tpu_custom_call.1} parent=27 // pred_check
          %p156 = pneg %p33
        $region30: #{tpu_custom_call.1} parent=27 // pred_check_branch
          %158 = sbr.rel (%p156) target = $region32
        $region31: #{tpu_custom_call.1} parent=27 // pred_region
          %p159 = scmp.lt.s32.totalorder %s13, 1
          %s160 = scalar_select %p159, %s13, 1
          %s161 = smul.addr %s160, 8
          %s162 = scalar_lea.vmem %s0, %s161
        $region32: #{tpu_custom_call.1} parent=27 // pred_fallthru
          _
      $region28: #{tpu_custom_call.1} parent=5 // pred_fallthru
        _
      %p163 = scmp.le.s32.totalorder 1, %s13
      %p164 = scmp.lt.s32.totalorder %s13, 3
      %p165 = pnand %p163, %p164
      %p166 = pneg %p165
      // Predicated region
      $region33: #{tpu_custom_call.1} parent=5 // pred_check
        _
      $region34: #{tpu_custom_call.1} parent=5 // pred_check_branch
        %168 = sbr.rel (%p165) target = $region36
      $region35: #{tpu_custom_call.1} parent=5 // pred_region
        %s169 = ssub.s32 %s13, 1
        %p170 = scmp.lt.s32.totalorder %s18, 1
        %s171 = scalar_select %p170, %s18, 1
        %s172 = smul.addr %s171, 8
        %s173 = scalar_lea.vmem %s0, %s172
        %p174 = pneg %p39
        %p175 = pneg %p36
        %p176 = pneg %p60
        %p177 = pneg %p57
        %p178 = pneg %p81
        %p179 = pneg %p78
        %p180 = pneg %p102
        %p181 = pneg %p99
        %p182 = pneg %p128
        %p183 = pneg %p125
        %s184 = sand.u32 %s115, 1
        %s185 = scalar_lea.sflag [#allocation3], %s184
        %s186 = sand.u32 %s115, 1
        %s187 = scalar_lea.vmem [#allocation2], %s186
        %p188 = scmp.lt.s32.totalorder %s18, 1
        %s189 = scalar_select %p188, %s18, 1
        %s190 = smul.addr %s189, 8
        %s191 = scalar_lea.vmem %s0, %s190
        %v192 = vld [vmem:[%s191] sm:$0xff]
        %v193 = vld [vmem:[%s1] sm:$0xff]
        %v194 = vld [vmem:[%s1 + $0x8] sm:$0xff]
        %v195 = vld [vmem:[%s1 + $0x10] sm:$0xff]
        %v196 = vld [vmem:[%s1 + $0x18] sm:$0xff]
        %v197 = vld [vmem:[%s2] sm:$0xff]
        %v198 = vld [vmem:[%s2 + $0x8] sm:$0xff]
        %v199 = vld [vmem:[%s2 + $0x10] sm:$0xff]
        %v200 = vld [vmem:[%s2 + $0x18] sm:$0xff]
        %v201 = vld [vmem:[%s3] sm:$0xff]
        %v202 = vld [vmem:[%s3 + $0x8] sm:$0xff]
        %v203 = vld [vmem:[%s3 + $0x10] sm:$0xff]
        %v204 = vld [vmem:[%s3 + $0x18] sm:$0xff]
        %vm205 = vcmask 261120
        %v207 = vsel %vm205, %v192, 0
        %209 = vmatprep.subr.mxu0 0.0
        %210 = vmatpush1.msra.mxu0 %v193
        %211 = vmatprep.subr.mxu0 0.0
        %212 = vmatpush1.msra.mxu0 %v194
        %213 = vmatprep.subr.mxu0 0.0
        %214 = vmatpush1.msra.mxu0 %v195
        %215 = vmatprep.subr.mxu0 0.0
        %216 = vmatpush1.msra.mxu0 %v196
        %217 = vmatprep.subr.mxu0 0.0
        %218 = vmatpush1.msra.mxu0 0.0
        %219 = vmatprep.subr.mxu0 0.0
        %220 = vmatpush1.msra.mxu0 0.0
        %221 = vmatprep.subr.mxu0 0.0
        %222 = vmatpush1.msra.mxu0 0.0
        %223 = vmatprep.subr.mxu0 0.0
        %224 = vmatpush1.msra.mxu0 0.0
        %225 = vmatprep.subr.mxu0 0.0
        %226 = vmatpush1.msra.mxu0 0.0
        %227 = vmatprep.subr.mxu0 0.0
        %228 = vmatpush1.msra.mxu0 0.0
        %229 = vmatprep.subr.mxu0 0.0
        %230 = vmatpush1.msra.mxu0 0.0
        %231 = vmatprep.subr.mxu0 0.0
        %232 = vmatpush1.msra.mxu0 0.0
        %233 = vmatprep.subr.mxu0 0.0
        %234 = vmatpush1.msra.mxu0 0.0
        %235 = vmatprep.subr.mxu0 0.0
        %236 = vmatpush1.msra.mxu0 0.0
        %237 = vmatprep.subr.mxu0 0.0
        %238 = vmatpush1.msra.mxu0 0.0
        %239 = vmatprep.subr.mxu0 0.0
        %240 = vmatpush1.msra.mxu0 0.0
        %241 = vmatprep.subr.mxu0 0.0
        %242 = vmatpush1.msra.mxu0 0.0
        %243 = vmatprep.subr.mxu0 0.0
        %244 = vmatpush1.msra.mxu0 0.0
        %245 = vmatprep.subr.mxu0 0.0
        %246 = vmatpush1.msra.mxu0 0.0
        %247 = vmatprep.subr.mxu0 0.0
        %248 = vmatpush1.msra.mxu0 0.0
        %249 = vmatprep.subr.mxu0 0.0
        %250 = vmatpush1.msra.mxu0 0.0
        %251 = vmatprep.subr.mxu0 0.0
        %252 = vmatpush1.msra.mxu0 0.0
        %253 = vmatprep.subr.mxu0 0.0
        %254 = vmatpush1.msra.mxu0 0.0
        %255 = vmatprep.subr.mxu0 0.0
        %256 = vmatpush1.msra.mxu0 0.0
        %257 = vmatprep.subr.mxu0 0.0
        %258 = vmatpush1.msra.mxu0 0.0
        %259 = vmatprep.subr.mxu0 0.0
        %260 = vmatpush1.msra.mxu0 0.0
        %261 = vmatprep.subr.mxu0 0.0
        %262 = vmatpush1.msra.mxu0 0.0
        %263 = vmatprep.subr.mxu0 0.0
        %264 = vmatpush1.msra.mxu0 0.0
        %265 = vmatprep.subr.mxu0 0.0
        %266 = vmatpush1.msra.mxu0 0.0
        %267 = vmatprep.subr.mxu0 0.0
        %268 = vmatpush1.msra.mxu0 0.0
        %269 = vmatprep.subr.mxu0 0.0
        %270 = vmatpush1.msra.mxu0 0.0
        %271 = vmatprep.subr.mxu0 0.0
        %272 = vmatpush1.msra.mxu0 0.0
        %273 = vmatprep.mubr.f32.mxu0 0.0
        %274 = vmatmul.mubr.f32.gmra.mrb[0].mxu0 %v207
        %v275 = vpop.f32.mrb[0].mxu0
        %v276 = vadd.f32 0.0, %v275
        %v277 = vpop.f32.mrb[0].mxu0
        %278 = vdwg.mxu0
        %279 = vmatprep.subr.mxu0 0.0
        %280 = vmatpush1.msra.mxu0 %v197
        %281 = vmatprep.subr.mxu0 0.0
        %282 = vmatpush1.msra.mxu0 %v198
        %283 = vmatprep.subr.mxu0 0.0
        %284 = vmatpush1.msra.mxu0 %v199
        %285 = vmatprep.subr.mxu0 0.0
        %286 = vmatpush1.msra.mxu0 %v200
        %287 = vmatprep.subr.mxu0 0.0
        %288 = vmatpush1.msra.mxu0 0.0
        %289 = vmatprep.subr.mxu0 0.0
        %290 = vmatpush1.msra.mxu0 0.0
        %291 = vmatprep.subr.mxu0 0.0
        %292 = vmatpush1.msra.mxu0 0.0
        %293 = vmatprep.subr.mxu0 0.0
        %294 = vmatpush1.msra.mxu0 0.0
        %295 = vmatprep.subr.mxu0 0.0
        %296 = vmatpush1.msra.mxu0 0.0
        %297 = vmatprep.subr.mxu0 0.0
        %298 = vmatpush1.msra.mxu0 0.0
        %299 = vmatprep.subr.mxu0 0.0
        %300 = vmatpush1.msra.mxu0 0.0
        %301 = vmatprep.subr.mxu0 0.0
        %302 = vmatpush1.msra.mxu0 0.0
        %303 = vmatprep.subr.mxu0 0.0
        %304 = vmatpush1.msra.mxu0 0.0
        %305 = vmatprep.subr.mxu0 0.0
        %306 = vmatpush1.msra.mxu0 0.0
        %307 = vmatprep.subr.mxu0 0.0
        %308 = vmatpush1.msra.mxu0 0.0
        %309 = vmatprep.subr.mxu0 0.0
        %310 = vmatpush1.msra.mxu0 0.0
        %311 = vmatprep.subr.mxu0 0.0
        %312 = vmatpush1.msra.mxu0 0.0
        %313 = vmatprep.subr.mxu0 0.0
        %314 = vmatpush1.msra.mxu0 0.0
        %315 = vmatprep.subr.mxu0 0.0
        %316 = vmatpush1.msra.mxu0 0.0
        %317 = vmatprep.subr.mxu0 0.0
        %318 = vmatpush1.msra.mxu0 0.0
        %319 = vmatprep.subr.mxu0 0.0
        %320 = vmatpush1.msra.mxu0 0.0
        %321 = vmatprep.subr.mxu0 0.0
        %322 = vmatpush1.msra.mxu0 0.0
        %323 = vmatprep.subr.mxu0 0.0
        %324 = vmatpush1.msra.mxu0 0.0
        %325 = vmatprep.subr.mxu0 0.0
        %326 = vmatpush1.msra.mxu0 0.0
        %327 = vmatprep.subr.mxu0 0.0
        %328 = vmatpush1.msra.mxu0 0.0
        %329 = vmatprep.subr.mxu0 0.0
        %330 = vmatpush1.msra.mxu0 0.0
        %331 = vmatprep.subr.mxu0 0.0
        %332 = vmatpush1.msra.mxu0 0.0
        %333 = vmatprep.subr.mxu0 0.0
        %334 = vmatpush1.msra.mxu0 0.0
        %335 = vmatprep.subr.mxu0 0.0
        %336 = vmatpush1.msra.mxu0 0.0
        %337 = vmatprep.subr.mxu0 0.0
        %338 = vmatpush1.msra.mxu0 0.0
        %339 = vmatprep.subr.mxu0 0.0
        %340 = vmatpush1.msra.mxu0 0.0
        %341 = vmatprep.subr.mxu0 0.0
        %342 = vmatpush1.msra.mxu0 0.0
        %343 = vmatprep.mubr.f32.mxu0 0.0
        %344 = vmatmul.mubr.f32.gmra.mrb[0].mxu0 %v207
        %v345 = vpop.f32.mrb[0].mxu0
        %v346 = vadd.f32 0.0, %v345
        %v347 = vpop.f32.mrb[0].mxu0
        %348 = vdwg.mxu0
        %349 = vmatprep.subr.mxu0 0.0
        %350 = vmatpush1.msra.mxu0 %v201
        %351 = vmatprep.subr.mxu0 0.0
        %352 = vmatpush1.msra.mxu0 %v202
        %353 = vmatprep.subr.mxu0 0.0
        %354 = vmatpush1.msra.mxu0 %v203
        %355 = vmatprep.subr.mxu0 0.0
        %356 = vmatpush1.msra.mxu0 %v204
        %357 = vmatprep.subr.mxu0 0.0
        %358 = vmatpush1.msra.mxu0 0.0
        %359 = vmatprep.subr.mxu0 0.0
        %360 = vmatpush1.msra.mxu0 0.0
        %361 = vmatprep.subr.mxu0 0.0
        %362 = vmatpush1.msra.mxu0 0.0
        %363 = vmatprep.subr.mxu0 0.0
        %364 = vmatpush1.msra.mxu0 0.0
        %365 = vmatprep.subr.mxu0 0.0
        %366 = vmatpush1.msra.mxu0 0.0
        %367 = vmatprep.subr.mxu0 0.0
        %368 = vmatpush1.msra.mxu0 0.0
        %369 = vmatprep.subr.mxu0 0.0
        %370 = vmatpush1.msra.mxu0 0.0
        %371 = vmatprep.subr.mxu0 0.0
        %372 = vmatpush1.msra.mxu0 0.0
        %373 = vmatprep.subr.mxu0 0.0
        %374 = vmatpush1.msra.mxu0 0.0
        %375 = vmatprep.subr.mxu0 0.0
        %376 = vmatpush1.msra.mxu0 0.0
        %377 = vmatprep.subr.mxu0 0.0
        %378 = vmatpush1.msra.mxu0 0.0
        %379 = vmatprep.subr.mxu0 0.0
        %380 = vmatpush1.msra.mxu0 0.0
        %381 = vmatprep.subr.mxu0 0.0
        %382 = vmatpush1.msra.mxu0 0.0
        %383 = vmatprep.subr.mxu0 0.0
        %384 = vmatpush1.msra.mxu0 0.0
        %385 = vmatprep.subr.mxu0 0.0
        %386 = vmatpush1.msra.mxu0 0.0
        %387 = vmatprep.subr.mxu0 0.0
        %388 = vmatpush1.msra.mxu0 0.0
        %389 = vmatprep.subr.mxu0 0.0
        %390 = vmatpush1.msra.mxu0 0.0
        %391 = vmatprep.subr.mxu0 0.0
        %392 = vmatpush1.msra.mxu0 0.0
        %393 = vmatprep.subr.mxu0 0.0
        %394 = vmatpush1.msra.mxu0 0.0
        %395 = vmatprep.subr.mxu0 0.0
        %396 = vmatpush1.msra.mxu0 0.0
        %397 = vmatprep.subr.mxu0 0.0
        %398 = vmatpush1.msra.mxu0 0.0
        %399 = vmatprep.subr.mxu0 0.0
        %400 = vmatpush1.msra.mxu0 0.0
        %401 = vmatprep.subr.mxu0 0.0
        %402 = vmatpush1.msra.mxu0 0.0
        %403 = vmatprep.subr.mxu0 0.0
        %404 = vmatpush1.msra.mxu0 0.0
        %405 = vmatprep.subr.mxu0 0.0
        %406 = vmatpush1.msra.mxu0 0.0
        %407 = vmatprep.subr.mxu0 0.0
        %408 = vmatpush1.msra.mxu0 0.0
        %409 = vmatprep.subr.mxu0 0.0
        %410 = vmatpush1.msra.mxu0 0.0
        %411 = vmatprep.subr.mxu0 0.0
        %412 = vmatpush1.msra.mxu0 0.0
        %413 = vmatprep.mubr.f32.mxu0 0.0
        %414 = vmatmul.mubr.f32.gmra.mrb[0].mxu0 %v207
        %v415 = vpop.f32.mrb[0].mxu0
        %v416 = vadd.f32 0.0, %v415
        %v417 = vpop.f32.mrb[0].mxu0
        %418 = vdwg.mxu0
        %vm419 = vcmask 130048
        %v421 = vsel %vm419, %v276, 0
        %v424 = vsel %vm419, %v346, 0
        %426 = vmatprep.subr.mxu0 0.0
        %427 = vmatpush1.xpose.msra.mxu0 %v424
        %428 = vmatprep.subr.mxu0 0.0
        %429 = vmatpush1.xpose.msra.mxu0 0.0
        %430 = vmatprep.subr.mxu0 0.0
        %431 = vmatpush1.xpose.msra.mxu0 0.0
        %432 = vmatprep.subr.mxu0 0.0
        %433 = vmatpush1.xpose.msra.mxu0 0.0
        %434 = vmatprep.subr.mxu0 0.0
        %435 = vmatpush1.xpose.msra.mxu0 0.0
        %436 = vmatprep.subr.mxu0 0.0
        %437 = vmatpush1.xpose.msra.mxu0 0.0
        %438 = vmatprep.subr.mxu0 0.0
        %439 = vmatpush1.xpose.msra.mxu0 0.0
        %440 = vmatprep.subr.mxu0 0.0
        %441 = vmatpush1.xpose.msra.mxu0 0.0
        %442 = vmatprep.subr.mxu0 0.0
        %443 = vmatpush1.xpose.msra.mxu0 0.0
        %444 = vmatprep.subr.mxu0 0.0
        %445 = vmatpush1.xpose.msra.mxu0 0.0
        %446 = vmatprep.subr.mxu0 0.0
        %447 = vmatpush1.xpose.msra.mxu0 0.0
        %448 = vmatprep.subr.mxu0 0.0
        %449 = vmatpush1.xpose.msra.mxu0 0.0
        %450 = vmatprep.subr.mxu0 0.0
        %451 = vmatpush1.xpose.msra.mxu0 0.0
        %452 = vmatprep.subr.mxu0 0.0
        %453 = vmatpush1.xpose.msra.mxu0 0.0
        %454 = vmatprep.subr.mxu0 0.0
        %455 = vmatpush1.xpose.msra.mxu0 0.0
        %456 = vmatprep.subr.mxu0 0.0
        %457 = vmatpush1.xpose.msra.mxu0 0.0
        %458 = vmatprep.subr.mxu0 0.0
        %459 = vmatpush1.xpose.msra.mxu0 0.0
        %460 = vmatprep.subr.mxu0 0.0
        %461 = vmatpush1.xpose.msra.mxu0 0.0
        %462 = vmatprep.subr.mxu0 0.0
        %463 = vmatpush1.xpose.msra.mxu0 0.0
        %464 = vmatprep.subr.mxu0 0.0
        %465 = vmatpush1.xpose.msra.mxu0 0.0
        %466 = vmatprep.subr.mxu0 0.0
        %467 = vmatpush1.xpose.msra.mxu0 0.0
        %468 = vmatprep.subr.mxu0 0.0
        %469 = vmatpush1.xpose.msra.mxu0 0.0
        %470 = vmatprep.subr.mxu0 0.0
        %471 = vmatpush1.xpose.msra.mxu0 0.0
        %472 = vmatprep.subr.mxu0 0.0
        %473 = vmatpush1.xpose.msra.mxu0 0.0
        %474 = vmatprep.subr.mxu0 0.0
        %475 = vmatpush1.xpose.msra.mxu0 0.0
        %476 = vmatprep.subr.mxu0 0.0
        %477 = vmatpush1.xpose.msra.mxu0 0.0
        %478 = vmatprep.subr.mxu0 0.0
        %479 = vmatpush1.xpose.msra.mxu0 0.0
        %480 = vmatprep.subr.mxu0 0.0
        %481 = vmatpush1.xpose.msra.mxu0 0.0
        %482 = vmatprep.subr.mxu0 0.0
        %483 = vmatpush1.xpose.msra.mxu0 0.0
        %484 = vmatprep.subr.mxu0 0.0
        %485 = vmatpush1.xpose.msra.mxu0 0.0
        %486 = vmatprep.subr.mxu0 0.0
        %487 = vmatpush1.xpose.msra.mxu0 0.0
        %488 = vmatprep.subr.mxu0 0.0
        %489 = vmatpush1.xpose.msra.mxu0 0.0
        %490 = vmatprep.mubr.f32.mxu0 0.0
        %491 = vmatmul.mubr.f32.gmra.mrb[0].mxu0 %v421
        %v492 = vpop.f32.mrb[0].mxu0
        %v493 = vadd.f32 0.0, %v492
        %v494 = vpop.f32.mrb[0].mxu0
        %495 = vdwg.mxu0
        %vm496 = vcmask 64512
        %v497 = vsel %vm496, %v493, -inf
        %498 = vmax.xlane.f32.xlu0 %v497
        %v499 = vpop.xlane.xlu0 %498
        %v500 = vsub.f32 %v493, %v499
        %v501 = vmul.f32 %v500, 1.442695
        %v502 = vpow.pop %v501
        %v503 = vsel %vm496, %v502, 0.0
        %504 = vadd.xlane.f32.xlu0 %v503
        %v505 = vpop.xlane.xlu0 %504
        %v506 = vrcp.pop %v505
        %v507 = vmul.f32 %v502, %v506
        %v509 = vsel %vm496, %v507, 0
        %511 = vmatprep.subr.mxu0 0.0
        %512 = vmatpush1.msra.mxu0 %v416
        %513 = vmatprep.subr.mxu0 0.0
        %514 = vmatpush1.msra.mxu0 0.0
        %515 = vmatprep.subr.mxu0 0.0
        %516 = vmatpush1.msra.mxu0 0.0
        %517 = vmatprep.subr.mxu0 0.0
        %518 = vmatpush1.msra.mxu0 0.0
        %519 = vmatprep.subr.mxu0 0.0
        %520 = vmatpush1.msra.mxu0 0.0
        %521 = vmatprep.subr.mxu0 0.0
        %522 = vmatpush1.msra.mxu0 0.0
        %523 = vmatprep.subr.mxu0 0.0
        %524 = vmatpush1.msra.mxu0 0.0
        %525 = vmatprep.subr.mxu0 0.0
        %526 = vmatpush1.msra.mxu0 0.0
        %527 = vmatprep.subr.mxu0 0.0
        %528 = vmatpush1.msra.mxu0 0.0
        %529 = vmatprep.subr.mxu0 0.0
        %530 = vmatpush1.msra.mxu0 0.0
        %531 = vmatprep.subr.mxu0 0.0
        %532 = vmatpush1.msra.mxu0 0.0
        %533 = vmatprep.subr.mxu0 0.0
        %534 = vmatpush1.msra.mxu0 0.0
        %535 = vmatprep.subr.mxu0 0.0
        %536 = vmatpush1.msra.mxu0 0.0
        %537 = vmatprep.subr.mxu0 0.0
        %538 = vmatpush1.msra.mxu0 0.0
        %539 = vmatprep.subr.mxu0 0.0
        %540 = vmatpush1.msra.mxu0 0.0
        %541 = vmatprep.subr.mxu0 0.0
        %542 = vmatpush1.msra.mxu0 0.0
        %543 = vmatprep.subr.mxu0 0.0
        %544 = vmatpush1.msra.mxu0 0.0
        %545 = vmatprep.subr.mxu0 0.0
        %546 = vmatpush1.msra.mxu0 0.0
        %547 = vmatprep.subr.mxu0 0.0
        %548 = vmatpush1.msra.mxu0 0.0
        %549 = vmatprep.subr.mxu0 0.0
        %550 = vmatpush1.msra.mxu0 0.0
        %551 = vmatprep.subr.mxu0 0.0
        %552 = vmatpush1.msra.mxu0 0.0
        %553 = vmatprep.subr.mxu0 0.0
        %554 = vmatpush1.msra.mxu0 0.0
        %555 = vmatprep.subr.mxu0 0.0
        %556 = vmatpush1.msra.mxu0 0.0
        %557 = vmatprep.subr.mxu0 0.0
        %558 = vmatpush1.msra.mxu0 0.0
        %559 = vmatprep.subr.mxu0 0.0
        %560 = vmatpush1.msra.mxu0 0.0
        %561 = vmatprep.subr.mxu0 0.0
        %562 = vmatpush1.msra.mxu0 0.0
        %563 = vmatprep.subr.mxu0 0.0
        %564 = vmatpush1.msra.mxu0 0.0
        %565 = vmatprep.subr.mxu0 0.0
        %566 = vmatpush1.msra.mxu0 0.0
        %567 = vmatprep.subr.mxu0 0.0
        %568 = vmatpush1.msra.mxu0 0.0
        %569 = vmatprep.subr.mxu0 0.0
        %570 = vmatpush1.msra.mxu0 0.0
        %571 = vmatprep.subr.mxu0 0.0
        %572 = vmatpush1.msra.mxu0 0.0
        %573 = vmatprep.subr.mxu0 0.0
        %574 = vmatpush1.msra.mxu0 0.0
        %575 = vmatprep.mubr.f32.mxu0 0.0
        %576 = vmatmul.mubr.f32.gmra.mrb[0].mxu0 %v509
        %v577 = vpop.f32.mrb[0].mxu0
        %v578 = vadd.f32 0.0, %v577
        %v579 = vpop.f32.mrb[0].mxu0
        %580 = vdwg.mxu0
        %v581 = vcombine.high %v578, 0.0
        %v583 = vunpack.c.l.s4 1983009808
        %v584 = vunpack.c.0.s8 %v583
        %v585 = vlaneseq
        %v586 = vshrl.u32 %v585, 7
        %v587 = vsub.s32 %v584, %v586
        %v588 = vrot.slane %v578, %v587
        %v590 = vunpack.c.l.s4 1983009808
        %v591 = vunpack.c.0.s8 %v590
        %v592 = vlaneseq
        %v593 = vshrl.u32 %v592, 7
        %v594 = vsub.s32 %v591, %v593
        %v595 = vrot.slane %v581, %v594
        %v596 = vcombine.high %v588, 0.0
        %v598 = vunpack.c.l.s4 1934713408
        %v599 = vunpack.c.0.s8 %v598
        %v600 = vlaneseq
        %v601 = vshrl.u32 %v600, 7
        %v602 = vsub.s32 %v599, %v601
        %v603 = vrot.slane %v588, %v602
        %v605 = vunpack.c.l.s4 1934713408
        %v606 = vunpack.c.0.s8 %v605
        %v607 = vlaneseq
        %v608 = vshrl.u32 %v607, 7
        %v609 = vsub.s32 %v606, %v608
        %v610 = vrot.slane %v596, %v609
        %v611 = vcombine.high %v595, 0.0
        %v613 = vunpack.c.l.s4 1934713408
        %v614 = vunpack.c.0.s8 %v613
        %v615 = vlaneseq
        %v616 = vshrl.u32 %v615, 7
        %v617 = vsub.s32 %v614, %v616
        %v618 = vrot.slane %v595, %v617
        %v620 = vunpack.c.l.s4 1934713408
        %v621 = vunpack.c.0.s8 %v620
        %v622 = vlaneseq
        %v623 = vshrl.u32 %v622, 7
        %v624 = vsub.s32 %v621, %v623
        %v625 = vrot.slane %v611, %v624
        %v626 = vcombine.high %v603, 0.0
        %v627 = vcombine.high %v610, 0.0
        %v628 = vcombine.high %v618, 0.0
        %v629 = vcombine.high %v625, 0.0
        %631 = vrot.lane.b32.xlu0 %v626, 16
        %v632 = vpop.permute.xlu0 %631
        %635 = vrot.lane.b32.xlu0 %v610, 32
        %v636 = vpop.permute.xlu0 %635
        %639 = vrot.lane.b32.xlu0 %v627, 48
        %v640 = vpop.permute.xlu0 %639
        %643 = vrot.lane.b32.xlu0 %v618, 64
        %v644 = vpop.permute.xlu0 %643
        %647 = vrot.lane.b32.xlu0 %v628, 80
        %v648 = vpop.permute.xlu0 %647
        %651 = vrot.lane.b32.xlu0 %v625, 96
        %v652 = vpop.permute.xlu0 %651
        %655 = vrot.lane.b32.xlu0 %v629, 112
        %v656 = vpop.permute.xlu0 %655
        %v658 = vsel %vm419, %v603, %v632
        %v659 = vsel %vm205, %v658, %v636
        %vm660 = vcmask 392192
        %v661 = vsel %vm660, %v659, %v640
        %vm662 = vcmask 523264
        %v663 = vsel %vm662, %v661, %v644
        %vm664 = vcmask 654336
        %v665 = vsel %vm664, %v663, %v648
        %vm666 = vcmask 785408
        %v667 = vsel %vm666, %v665, %v652
        %vm668 = vcmask 916480
        %v669 = vsel %vm668, %v667, %v656
        %670 = vst [vmem:[%s187] sm:$0x1] %v669
        %s671 = sand.u32 %s115, 1
        %s672 = scalar_lea.sflag [#allocation3], %s671
        %s673 = sand.u32 %s115, 1
        %s674 = scalar_lea.vmem [#allocation2], %s673
        // Predicated region
        $region37: #{tpu_custom_call.1} parent=35 // pred_check
          %p675 = pneg %p125
        $region38: #{tpu_custom_call.1} parent=35 // pred_check_branch
          %677 = sbr.rel (%p675) target = $region40
        $region39: #{tpu_custom_call.1} parent=35 // pred_region
          %s679 = ssub.s32 16, 16
          %680 = vsyncadd %s672, %s679
          %s681 = smul.addr %s18, 16
          %s682 = scalar_lea.hbm %s4, %s681
          %s684 = sshll.u32 %s674, 4
          %s685 = int_to_ptr.vmem [resolvable:$true] %s684
          %687 = dma.vmem_to_hbm [thread:$0]  %s685, 16, %s682, %s672
        $region40: #{tpu_custom_call.1} parent=35 // pred_fallthru
          _
      $region36: #{tpu_custom_call.1} parent=5 // pred_fallthru
        _
      %p688 = scmp.le.s32.totalorder 2, %s13
      // Predicated region
      $region41: #{tpu_custom_call.1} parent=5 // pred_check
        %p689 = pneg %p688
      $region42: #{tpu_custom_call.1} parent=5 // pred_check_branch
        %691 = sbr.rel (%p689) target = $region44
      $region43: #{tpu_custom_call.1} parent=5 // pred_region
        %s692 = ssub.s32 %s13, 2
        // Predicated region
        $region45: #{tpu_custom_call.1} parent=43 // pred_check
          %p693 = pneg %p131
        $region46: #{tpu_custom_call.1} parent=43 // pred_check_branch
          %695 = sbr.rel (%p693) target = $region48
        $region47: #{tpu_custom_call.1} parent=43 // pred_region
          %s696 = sand.u32 %s116, 1
          %s697 = scalar_lea.sflag [#allocation3], %s696
          %s698 = sand.u32 %s116, 1
          %s699 = scalar_lea.vmem [#allocation2], %s698
          %700 = dma.done %s697, 16
        $region48: #{tpu_custom_call.1} parent=43 // pred_fallthru
          _
      $region44: #{tpu_custom_call.1} parent=5 // pred_fallthru
        _
    $region6: #{tpu_custom_call.1} parent=1 // loop_footer
      %s17 = sadd.s32 1, %s13
    $region7: #{tpu_custom_call.1} parent=1 // loop_footer_branch
      %12 = sbr.rel target = $region3
    $region8: #{tpu_custom_call.1} parent=1 // loop_exit
      _
    %701 = vsyncpa [#allocation3], 1
    %s702 = scalar_lea.sflag [#allocation3], 1
    %703 = vsyncpa %s702, 1

</llo_original>
